<compile_context>
chip_gen: v7x
topology: tpu7x:2x2x1
jax: 0.10.0
libtpu: 0.0.40
codegen_flags: <defaults>
</compile_context>

<pallas_src>
import functools

import jax
import jax.numpy as jnp
from jax.experimental import pallas as pl
from jax.experimental.pallas import tpu as pltpu


def _deformation_kernel(x_ref, w1a_ref, w1b_ref, b1_ref, w2_ref, b2_ref,
                        w3_ref, b3_ref, w4_ref, o_ref, *, act_dtype, mxu_dtype):
    x = x_ref[...]                         # (2, TM) f32, lane-major rows
    x0 = x[0:1, :]                         # (1, TM)
    x1 = x[1:2, :]                         # (1, TM)

    # lin1 (in_features = 2): outer-product FMA on the VPU in f32 -- a K=2
    # matmul would waste a full MXU pass.  w1 columns are pre-split refs.
    y = w1a_ref[...] * x0 + w1b_ref[...] * x1 + b1_ref[...]          # (48, TM) f32
    y = jnp.tanh(y.astype(act_dtype))

    # lin2 / lin3: lane-dense MXU matmuls; operands pre-cast to mxu_dtype
    # (bf16 is single-pass MXU-native), f32 accumulate, f32 bias add.
    y = jnp.dot(w2_ref[...], y.astype(mxu_dtype),
                preferred_element_type=jnp.float32) + b2_ref[...]    # (48, TM) f32
    y = jnp.tanh(y.astype(act_dtype))
    y = jnp.dot(w3_ref[...], y.astype(mxu_dtype),
                preferred_element_type=jnp.float32) + b3_ref[...]    # (32, TM) f32
    y = jnp.tanh(y.astype(act_dtype))

    # lin4 (no bias): (2, 32) @ (32, TM) -> (2, TM), f32 accumulate.
    y = jnp.dot(w4_ref[...], y.astype(mxu_dtype),
                preferred_element_type=jnp.float32)                  # (2, TM) f32

    # Boundary mask (x0 - 0) * (x0 - 1) * (x1 + 1), broadcast over the two
    # output feature rows.  Full-width (unmasked) lane-dense store.
    bdry = x0 * (x0 - 1.0) * (x1 + 1.0)                              # (1, TM)
    o_ref[...] = (y * bdry).astype(o_ref.dtype)


def _default_dtypes():
    """Chip-gated dtype choice: (tanh/act dtype, MXU operand dtype)."""
    kind = jax.devices()[0].device_kind.lower()
    if ("v6" in kind) or ("v7" in kind):
        # bf16-capable EUP/VPU: run the (EUP-bound) tanh path in bf16 too.
        return jnp.bfloat16, jnp.bfloat16
    # v5e and older: no bf16 VPU/EUP -> keep tanh in f32; bf16 only on the MXU.
    return jnp.float32, jnp.bfloat16


def deformation_network(x, params, *, tm=8192, compute_dtype=None, mxu_dtype=None):
    """x: (B, N, 2) float32. Returns (B, N, 2) float32."""
    w1, b1, w2, b2, w3, b3, w4 = params
    B, N, F = x.shape
    assert F == 2
    R = B * N

    auto_act, auto_mxu = _default_dtypes()
    act_dtype = auto_act if compute_dtype is None else compute_dtype
    mm_dtype = auto_mxu if mxu_dtype is None else mxu_dtype

    # Tile selection: big tile to amortize per-step overhead, but capped so the
    # 1-D parallel grid has >= 2 steps whenever there are enough rows (feeds
    # both v7x TensorCores).  Keep the tile a multiple of 256 lanes.
    tm_cap = 256 * max(1, pl.cdiv(R, 2 * 256))
    tm = max(256, (min(tm, tm_cap) // 256) * 256)

    n_tiles = pl.cdiv(R, tm)
    r_pad = n_tiles * tm

    # Lane-major: features on sublanes, rows on lanes.  Zero-pad rows to a
    # tile multiple (padded columns compute benign values and are sliced off).
    xt = x.reshape(R, 2).T.astype(jnp.float32)                        # (2, R)
    if r_pad != R:
        xt = jnp.pad(xt, ((0, 0), (0, r_pad - R)))

    # Pre-split w1 columns (no per-step in-kernel weight slices); cast the MXU
    # weights once in the wrapper.  Biases stay f32 (added to f32 accumulators).
    w1a = w1[:, 0:1].astype(jnp.float32)
    w1b = w1[:, 1:2].astype(jnp.float32)
    b1f = b1.astype(jnp.float32)
    b2f = b2.astype(jnp.float32)
    b3f = b3.astype(jnp.float32)
    w2c = w2.astype(mm_dtype)
    w3c = w3.astype(mm_dtype)
    w4c = w4.astype(mm_dtype)

    kernel = functools.partial(_deformation_kernel,
                               act_dtype=act_dtype, mxu_dtype=mm_dtype)

    full = lambda shape: pl.BlockSpec(shape, lambda i: (0,) * len(shape))

    out_t = pl.pallas_call(
        kernel,
        out_shape=jax.ShapeDtypeStruct((2, r_pad), jnp.float32),
        grid_spec=pltpu.PrefetchScalarGridSpec(
            num_scalar_prefetch=0,
            grid=(n_tiles,),
            in_specs=[
                pl.BlockSpec((2, tm), lambda i: (0, i)),      # x rows (lane-major)
                full((48, 1)), full((48, 1)), full((48, 1)),  # lin1: w col0, col1, bias
                full((48, 48)), full((48, 1)),                # lin2
                full((32, 48)), full((32, 1)),                # lin3
                full((2, 32)),                                # lin4 (no bias)
            ],
            out_specs=pl.BlockSpec((2, tm), lambda i: (0, i)),
        ),
        compiler_params=pltpu.CompilerParams(
            dimension_semantics=("parallel",)),
    )(xt, w1a, w1b, b1f, w2c, b2f, w3c, b3f, w4c)

    return out_t[:, :R].T.reshape(B, N, 2)


def init_params(key):
    """Deterministic synthetic parameters with nn.Linear-like shapes.

    Stored as (out_features, in_features); biases as (out_features, 1).
    """
    ks = jax.random.split(key, 7)
    scale = 0.1
    w1 = scale * jax.random.normal(ks[0], (48, 2), jnp.float32)
    b1 = scale * jax.random.normal(ks[1], (48, 1), jnp.float32)
    w2 = scale * jax.random.normal(ks[2], (48, 48), jnp.float32)
    b2 = scale * jax.random.normal(ks[3], (48, 1), jnp.float32)
    w3 = scale * jax.random.normal(ks[4], (32, 48), jnp.float32)
    b3 = scale * jax.random.normal(ks[5], (32, 1), jnp.float32)
    w4 = scale * jax.random.normal(ks[6], (2, 32), jnp.float32)
    return (w1, b1, w2, b2, w3, b3, w4)


def _reference(x, params):
    w1, b1, w2, b2, w3, b3, w4 = params
    y = jnp.tanh(x @ w1.T + b1[:, 0])
    y = jnp.tanh(y @ w2.T + b2[:, 0])
    y = jnp.tanh(y @ w3.T + b3[:, 0])
    y = y @ w4.T
    mask = (x[..., 0] - 0.0) * (x[..., 0] - 1.0) * (x[..., 1] + 1.0)
    return y * mask[..., None]


if __name__ == "__main__":
    key = jax.random.PRNGKey(0)
    kp, kx1, kx2 = jax.random.split(key, 3)
    params = init_params(kp)

    # Small shape consistent with the module's (B, N, 2) input.
    B, N = 2, 8
    x = jax.random.uniform(kx1, (B, N, 2), jnp.float32, minval=-1.0, maxval=1.0)
    ref = _reference(x, params)

    # 1) Exact-semantics check: forced full-f32 path, tight tolerance.
    out_f32 = jax.block_until_ready(
        deformation_network(x, params,
                            compute_dtype=jnp.float32, mxu_dtype=jnp.float32))
    assert out_f32.shape == (B, N, 2) and out_f32.dtype == jnp.float32
    assert jnp.allclose(out_f32, ref, atol=1e-5, rtol=1e-5)

    # 2) Default chip-gated fast path (bf16 MXU, bf16 tanh on v6e/v7x): looser
    #    tolerance, as expected for bf16 arithmetic.
    out_fast = jax.block_until_ready(deformation_network(x, params))
    assert out_fast.shape == (B, N, 2)
    assert jnp.allclose(out_fast, ref, atol=2e-2, rtol=5e-2)

    # 3) Multi-tile + row-padding path: R = 600 rows -> tile cap gives a grid
    #    of 2 tiles of 512 rows, padded to 1024.
    B2, N2 = 2, 300
    x2 = jax.random.uniform(kx2, (B2, N2, 2), jnp.float32, minval=-1.0, maxval=1.0)
    ref2 = _reference(x2, params)
    out2_f32 = jax.block_until_ready(
        deformation_network(x2, params,
                            compute_dtype=jnp.float32, mxu_dtype=jnp.float32))
    assert out2_f32.shape == (B2, N2, 2)
    assert jnp.allclose(out2_f32, ref2, atol=1e-5, rtol=1e-5)
    out2_fast = jax.block_until_ready(deformation_network(x2, params))
    assert jnp.allclose(out2_fast, ref2, atol=2e-2, rtol=5e-2)

    print("KERNEL_OK")
</pallas_src>

<mosaic_0001>
module attributes {stable_mosaic.version = 11 : i64} {
  func.func @_deformation_kernel(%arg0: i32, %arg1: memref<2x256xf32, #tpu.memory_space<vmem>>, %arg2: memref<48x1xf32, #tpu.memory_space<vmem>>, %arg3: memref<48x1xf32, #tpu.memory_space<vmem>>, %arg4: memref<48x1xf32, #tpu.memory_space<vmem>>, %arg5: memref<48x48xf32, #tpu.memory_space<vmem>>, %arg6: memref<48x1xf32, #tpu.memory_space<vmem>>, %arg7: memref<32x48xf32, #tpu.memory_space<vmem>>, %arg8: memref<32x1xf32, #tpu.memory_space<vmem>>, %arg9: memref<2x32xf32, #tpu.memory_space<vmem>>, %arg10: memref<2x256xf32, #tpu.memory_space<vmem>>) attributes {dimension_semantics = [#tpu.dimension_semantics<parallel>], iteration_bounds = array<i64: 1>, scalar_prefetch = 0 : i64, scratch_operands = 0 : i64, tpu.core_type = #tpu.core_type<tc>, window_params = [{transform_indices = @transform_0, window_bounds = array<i64: 2, 256>}, {pipeline_mode = #tpu.pipeline_mode<synchronous>, transform_indices = @transform_1, window_bounds = array<i64: 48, 1>}, {pipeline_mode = #tpu.pipeline_mode<synchronous>, transform_indices = @transform_2, window_bounds = array<i64: 48, 1>}, {pipeline_mode = #tpu.pipeline_mode<synchronous>, transform_indices = @transform_3, window_bounds = array<i64: 48, 1>}, {pipeline_mode = #tpu.pipeline_mode<synchronous>, transform_indices = @transform_4, window_bounds = array<i64: 48, 48>}, {pipeline_mode = #tpu.pipeline_mode<synchronous>, transform_indices = @transform_5, window_bounds = array<i64: 48, 1>}, {pipeline_mode = #tpu.pipeline_mode<synchronous>, transform_indices = @transform_6, window_bounds = array<i64: 32, 48>}, {pipeline_mode = #tpu.pipeline_mode<synchronous>, transform_indices = @transform_7, window_bounds = array<i64: 32, 1>}, {pipeline_mode = #tpu.pipeline_mode<synchronous>, transform_indices = @transform_8, window_bounds = array<i64: 2, 32>}, {transform_indices = @transform_9, window_bounds = array<i64: 2, 256>}]} {
    %c0 = arith.constant 0 : index
    %c0_0 = arith.constant 0 : index
    %0 = vector.load %arg1[%c0, %c0_0] : memref<2x256xf32, #tpu.memory_space<vmem>>, vector<2x256xf32>
    %1 = vector.extract_strided_slice %0 {offsets = [0, 0], sizes = [1, 256], strides = [1, 1]} : vector<2x256xf32> to vector<1x256xf32>
    %2 = vector.extract_strided_slice %0 {offsets = [1, 0], sizes = [1, 256], strides = [1, 1]} : vector<2x256xf32> to vector<1x256xf32>
    %c0_1 = arith.constant 0 : index
    %c0_2 = arith.constant 0 : index
    %3 = vector.load %arg2[%c0_1, %c0_2] : memref<48x1xf32, #tpu.memory_space<vmem>>, vector<48x1xf32>
    %4 = vector.broadcast %3 : vector<48x1xf32> to vector<48x256xf32>
    %5 = vector.broadcast %1 : vector<1x256xf32> to vector<48x256xf32>
    %6 = arith.mulf %4, %5 : vector<48x256xf32>
    %c0_3 = arith.constant 0 : index
    %c0_4 = arith.constant 0 : index
    %7 = vector.load %arg3[%c0_3, %c0_4] : memref<48x1xf32, #tpu.memory_space<vmem>>, vector<48x1xf32>
    %8 = vector.broadcast %7 : vector<48x1xf32> to vector<48x256xf32>
    %9 = vector.broadcast %2 : vector<1x256xf32> to vector<48x256xf32>
    %10 = arith.mulf %8, %9 : vector<48x256xf32>
    %11 = arith.addf %6, %10 : vector<48x256xf32>
    %c0_5 = arith.constant 0 : index
    %c0_6 = arith.constant 0 : index
    %12 = vector.load %arg4[%c0_5, %c0_6] : memref<48x1xf32, #tpu.memory_space<vmem>>, vector<48x1xf32>
    %13 = vector.broadcast %12 : vector<48x1xf32> to vector<48x256xf32>
    %14 = arith.addf %11, %13 : vector<48x256xf32>
    %15 = math.tanh %14 : vector<48x256xf32>
    %c0_7 = arith.constant 0 : index
    %c0_8 = arith.constant 0 : index
    %16 = vector.load %arg5[%c0_7, %c0_8] : memref<48x48xf32, #tpu.memory_space<vmem>>, vector<48x48xf32>
    %cst = arith.constant dense<0.000000e+00> : vector<48x256xf32>
    %17 = tpu.matmul %16, %15, %cst {dimension_numbers = #tpu.dot_dimension_numbers<[1], [0], [0], [1], [0, 0, 1, 1], [], []>} : vector<48x48xf32>, vector<48x256xf32>, vector<48x256xf32> -> vector<48x256xf32>
    %c0_9 = arith.constant 0 : index
    %c0_10 = arith.constant 0 : index
    %18 = vector.load %arg6[%c0_9, %c0_10] : memref<48x1xf32, #tpu.memory_space<vmem>>, vector<48x1xf32>
    %19 = vector.broadcast %18 : vector<48x1xf32> to vector<48x256xf32>
    %20 = arith.addf %17, %19 : vector<48x256xf32>
    %21 = math.tanh %20 : vector<48x256xf32>
    %c0_11 = arith.constant 0 : index
    %c0_12 = arith.constant 0 : index
    %22 = vector.load %arg7[%c0_11, %c0_12] : memref<32x48xf32, #tpu.memory_space<vmem>>, vector<32x48xf32>
    %cst_13 = arith.constant dense<0.000000e+00> : vector<32x256xf32>
    %23 = tpu.matmul %22, %21, %cst_13 {dimension_numbers = #tpu.dot_dimension_numbers<[1], [0], [0], [1], [0, 0, 1, 1], [], []>} : vector<32x48xf32>, vector<48x256xf32>, vector<32x256xf32> -> vector<32x256xf32>
    %c0_14 = arith.constant 0 : index
    %c0_15 = arith.constant 0 : index
    %24 = vector.load %arg8[%c0_14, %c0_15] : memref<32x1xf32, #tpu.memory_space<vmem>>, vector<32x1xf32>
    %25 = vector.broadcast %24 : vector<32x1xf32> to vector<32x256xf32>
    %26 = arith.addf %23, %25 : vector<32x256xf32>
    %27 = math.tanh %26 : vector<32x256xf32>
    %c0_16 = arith.constant 0 : index
    %c0_17 = arith.constant 0 : index
    %28 = vector.load %arg9[%c0_16, %c0_17] : memref<2x32xf32, #tpu.memory_space<vmem>>, vector<2x32xf32>
    %cst_18 = arith.constant dense<0.000000e+00> : vector<2x256xf32>
    %29 = tpu.matmul %28, %27, %cst_18 {dimension_numbers = #tpu.dot_dimension_numbers<[1], [0], [0], [1], [0, 0, 1, 1], [], []>} : vector<2x32xf32>, vector<32x256xf32>, vector<2x256xf32> -> vector<2x256xf32>
    %cst_19 = arith.constant 1.000000e+00 : f32
    %30 = vector.broadcast %cst_19 : f32 to vector<1x256xf32>
    %31 = arith.subf %1, %30 : vector<1x256xf32>
    %32 = arith.mulf %1, %31 : vector<1x256xf32>
    %cst_20 = arith.constant 1.000000e+00 : f32
    %33 = vector.broadcast %cst_20 : f32 to vector<1x256xf32>
    %34 = arith.addf %2, %33 : vector<1x256xf32>
    %35 = arith.mulf %32, %34 : vector<1x256xf32>
    %36 = vector.broadcast %35 : vector<1x256xf32> to vector<2x256xf32>
    %37 = arith.mulf %29, %36 : vector<2x256xf32>
    %c0_21 = arith.constant 0 : index
    %c0_22 = arith.constant 0 : index
    %38 = vector.load %arg10[%c0_21, %c0_22] : memref<2x256xf32, #tpu.memory_space<vmem>>, vector<2x256xf32>
    tpu.vector_store %arg10[%c0_21, %c0_22], %37 {strides = array<i32>} : memref<2x256xf32, #tpu.memory_space<vmem>>, vector<2x256xf32>,
    return
  }
  func.func @transform_0(%arg0: i32) -> (i32, i32) {
    %c0_i32 = arith.constant 0 : i32
    %c0_i32_0 = arith.constant 0 : i32
    return %c0_i32, %arg0 : i32, i32
  }
  func.func @transform_1(%arg0: i32) -> (i32, i32) {
    %c0_i32 = arith.constant 0 : i32
    %c0_i32_0 = arith.constant 0 : i32
    %c0_i32_1 = arith.constant 0 : i32
    return %c0_i32, %c0_i32_0 : i32, i32
  }
  func.func @transform_2(%arg0: i32) -> (i32, i32) {
    %c0_i32 = arith.constant 0 : i32
    %c0_i32_0 = arith.constant 0 : i32
    %c0_i32_1 = arith.constant 0 : i32
    return %c0_i32, %c0_i32_0 : i32, i32
  }
  func.func @transform_3(%arg0: i32) -> (i32, i32) {
    %c0_i32 = arith.constant 0 : i32
    %c0_i32_0 = arith.constant 0 : i32
    %c0_i32_1 = arith.constant 0 : i32
    return %c0_i32, %c0_i32_0 : i32, i32
  }
  func.func @transform_4(%arg0: i32) -> (i32, i32) {
    %c0_i32 = arith.constant 0 : i32
    %c0_i32_0 = arith.constant 0 : i32
    %c0_i32_1 = arith.constant 0 : i32
    return %c0_i32, %c0_i32_0 : i32, i32
  }
  func.func @transform_5(%arg0: i32) -> (i32, i32) {
    %c0_i32 = arith.constant 0 : i32
    %c0_i32_0 = arith.constant 0 : i32
    %c0_i32_1 = arith.constant 0 : i32
    return %c0_i32, %c0_i32_0 : i32, i32
  }
  func.func @transform_6(%arg0: i32) -> (i32, i32) {
    %c0_i32 = arith.constant 0 : i32
    %c0_i32_0 = arith.constant 0 : i32
    %c0_i32_1 = arith.constant 0 : i32
    return %c0_i32, %c0_i32_0 : i32, i32
  }
  func.func @transform_7(%arg0: i32) -> (i32, i32) {
    %c0_i32 = arith.constant 0 : i32
    %c0_i32_0 = arith.constant 0 : i32
    %c0_i32_1 = arith.constant 0 : i32
    return %c0_i32, %c0_i32_0 : i32, i32
  }
  func.func @transform_8(%arg0: i32) -> (i32, i32) {
    %c0_i32 = arith.constant 0 : i32
    %c0_i32_0 = arith.constant 0 : i32
    %c0_i32_1 = arith.constant 0 : i32
    return %c0_i32, %c0_i32_0 : i32, i32
  }
  func.func @transform_9(%arg0: i32) -> (i32, i32) {
    %c0_i32 = arith.constant 0 : i32
    %c0_i32_0 = arith.constant 0 : i32
    return %c0_i32, %arg0 : i32, i32
  }
}

</mosaic_0001>

<llo_original>
// kernel: tpu_custom_call.1
$region0: #{tpu_custom_call.1}
  #allocation0 [shape = 'u32[]', space=smem, size = 0x4, offset = 0x4, fixed_abs, tag = 'smem constant byte address 0x4 - core index']
  #allocation1 [shape = 'u32[144,128]{1,0:T(1,128)}', space=vmem, size = 0x12000, scoped, tag = 'internal scratch']
  %s0 = inlined_call_operand.vmem [shape: f32[2,256], index: 0, kind: input, shape index: {}]
  %s1 = inlined_call_operand.vmem [shape: f32[48,1], index: 1, kind: input, shape index: {}]
  %s2 = inlined_call_operand.vmem [shape: f32[48,1], index: 2, kind: input, shape index: {}]
  %s3 = inlined_call_operand.vmem [shape: f32[48,1], index: 3, kind: input, shape index: {}]
  %s4 = inlined_call_operand.vmem [shape: f32[48,48], index: 4, kind: input, shape index: {}]
  %s5 = inlined_call_operand.vmem [shape: f32[48,1], index: 5, kind: input, shape index: {}]
  %s6 = inlined_call_operand.vmem [shape: f32[32,48], index: 6, kind: input, shape index: {}]
  %s7 = inlined_call_operand.vmem [shape: f32[32,1], index: 7, kind: input, shape index: {}]
  %s8 = inlined_call_operand.vmem [shape: f32[2,32], index: 8, kind: input, shape index: {}]
  %s9 = inlined_call_operand.hbm [shape: f32[2,256], index: 9, kind: output, shape index: {}]
  %s10 = sld [smem:[#allocation0]]
  $region46: #{tpu_custom_call.1} parent=0
    _
  %s12 = ssub.s32 1, %s10
  %s13 = scalar_select 0, %s12, %s10
  $region1: #{tpu_custom_call.1} parent=0
    #allocation2 [shape = 'u8[2048]{0}', space=vmem, size = 0x800, scoped, tag = 'output window, operand 0, single buffered']
    #allocation3 [shape = 's32[1]{0}', space=sflag, size = 0x4, scoped, tag = 'scoped memory for tpu_custom_call.1']
    %14 = vsyncpa [#allocation3], 0
    // Predicated region
    $region2: #{tpu_custom_call.1} parent=1 // pred_check
      _
    $region3: #{tpu_custom_call.1} parent=1 // pred_check_branch
      %16 = sbr.rel (0) target = $region5
    $region4: #{tpu_custom_call.1} parent=1 // pred_region
      _
    $region5: #{tpu_custom_call.1} parent=1 // pred_fallthru
      _
    // Predicated region
    $region6: #{tpu_custom_call.1} parent=1 // pred_check
      _
    $region7: #{tpu_custom_call.1} parent=1 // pred_check_branch
      %18 = sbr.rel (0) target = $region9
    $region8: #{tpu_custom_call.1} parent=1 // pred_region
      _
    $region9: #{tpu_custom_call.1} parent=1 // pred_fallthru
      _
    // Predicated region
    $region10: #{tpu_custom_call.1} parent=1 // pred_check
      _
    $region11: #{tpu_custom_call.1} parent=1 // pred_check_branch
      %20 = sbr.rel (0) target = $region13
    $region12: #{tpu_custom_call.1} parent=1 // pred_region
      _
    $region13: #{tpu_custom_call.1} parent=1 // pred_fallthru
      _
    // Predicated region
    $region14: #{tpu_custom_call.1} parent=1 // pred_check
      _
    $region15: #{tpu_custom_call.1} parent=1 // pred_check_branch
      %22 = sbr.rel (0) target = $region17
    $region16: #{tpu_custom_call.1} parent=1 // pred_region
      _
    $region17: #{tpu_custom_call.1} parent=1 // pred_fallthru
      _
    // Predicated region
    $region18: #{tpu_custom_call.1} parent=1 // pred_check
      _
    $region19: #{tpu_custom_call.1} parent=1 // pred_check_branch
      %24 = sbr.rel (0) target = $region21
    $region20: #{tpu_custom_call.1} parent=1 // pred_region
      _
    $region21: #{tpu_custom_call.1} parent=1 // pred_fallthru
      _
    // Predicated region
    $region22: #{tpu_custom_call.1} parent=1 // pred_check
      _
    $region23: #{tpu_custom_call.1} parent=1 // pred_check_branch
      %26 = sbr.rel (0) target = $region25
    $region24: #{tpu_custom_call.1} parent=1 // pred_region
      _
    $region25: #{tpu_custom_call.1} parent=1 // pred_fallthru
      _
    // Predicated region
    $region26: #{tpu_custom_call.1} parent=1 // pred_check
      _
    $region27: #{tpu_custom_call.1} parent=1 // pred_check_branch
      %28 = sbr.rel (0) target = $region29
    $region28: #{tpu_custom_call.1} parent=1 // pred_region
      _
    $region29: #{tpu_custom_call.1} parent=1 // pred_fallthru
      _
    // Predicated region
    $region30: #{tpu_custom_call.1} parent=1 // pred_check
      _
    $region31: #{tpu_custom_call.1} parent=1 // pred_check_branch
      %30 = sbr.rel (0) target = $region33
    $region32: #{tpu_custom_call.1} parent=1 // pred_region
      _
    $region33: #{tpu_custom_call.1} parent=1 // pred_fallthru
      _
    // Predicated region
    $region34: #{tpu_custom_call.1} parent=1 // pred_check
      _
    $region35: #{tpu_custom_call.1} parent=1 // pred_check_branch
      %32 = sbr.rel (0) target = $region37
    $region36: #{tpu_custom_call.1} parent=1 // pred_region
      _
    $region37: #{tpu_custom_call.1} parent=1 // pred_fallthru
      _
    %v33 = vld [vmem:[%s0] sm:$0xf]
    %v34 = vld [vmem:[%s1] sm:$0xff]
    %v35 = vld [vmem:[%s1 + $0x8] sm:$0xff]
    %v36 = vld [vmem:[%s1 + $0x10] sm:$0xff]
    %v37 = vld [vmem:[%s1 + $0x18] sm:$0xff]
    %v38 = vld [vmem:[%s1 + $0x20] sm:$0xff]
    %v39 = vld [vmem:[%s1 + $0x28] sm:$0xff]
    %41 = vset.pattern.permute.xlu0 0
    %42 = vperm.xlu0 %41, %v34
    %v43 = vpop.permute.xlu0 %42
    %46 = vset.pattern.permute.xlu0 0
    %47 = vperm.xlu0 %46, %v35
    %v48 = vpop.permute.xlu0 %47
    %51 = vset.pattern.permute.xlu0 0
    %52 = vperm.xlu0 %51, %v36
    %v53 = vpop.permute.xlu0 %52
    %56 = vset.pattern.permute.xlu0 0
    %57 = vperm.xlu0 %56, %v37
    %v58 = vpop.permute.xlu0 %57
    %61 = vset.pattern.permute.xlu0 0
    %62 = vperm.xlu0 %61, %v38
    %v63 = vpop.permute.xlu0 %62
    %66 = vset.pattern.permute.xlu0 0
    %67 = vperm.xlu0 %66, %v39
    %v68 = vpop.permute.xlu0 %67
    %v71 = vlaneseq
    %v72 = vshrl.u32 %v71, 7
    %v73 = vsub.s32 0, %v72
    %v74 = vrot.slane %v33, %v73
    %v75 = vlaneseq
    %v76 = vshrl.u32 %v75, 7
    %v77 = vsub.s32 2, %v76
    %v78 = vrot.slane %v33, %v77
    %v81 = vlaneseq
    %v82 = vshrl.u32 %v81, 7
    %v83 = vsub.s32 0, %v82
    %v84 = vrot.slane %v74, %v83
    %v85 = vlaneseq
    %v86 = vshrl.u32 %v85, 7
    %v87 = vsub.s32 0, %v86
    %v88 = vrot.slane %v78, %v87
    %v89 = vmul.f32 %v43, %v84
    %v90 = vmul.f32 %v43, %v88
    %v91 = vmul.f32 %v48, %v84
    %v92 = vmul.f32 %v48, %v88
    %v93 = vmul.f32 %v53, %v84
    %v94 = vmul.f32 %v53, %v88
    %v95 = vmul.f32 %v58, %v84
    %v96 = vmul.f32 %v58, %v88
    %v97 = vmul.f32 %v63, %v84
    %v98 = vmul.f32 %v63, %v88
    %v99 = vmul.f32 %v68, %v84
    %v100 = vmul.f32 %v68, %v88
    %v101 = vld [vmem:[%s2] sm:$0xff]
    %v102 = vld [vmem:[%s2 + $0x8] sm:$0xff]
    %v103 = vld [vmem:[%s2 + $0x10] sm:$0xff]
    %v104 = vld [vmem:[%s2 + $0x18] sm:$0xff]
    %v105 = vld [vmem:[%s2 + $0x20] sm:$0xff]
    %v106 = vld [vmem:[%s2 + $0x28] sm:$0xff]
    %108 = vset.pattern.permute.xlu0 0
    %109 = vperm.xlu0 %108, %v101
    %v110 = vpop.permute.xlu0 %109
    %113 = vset.pattern.permute.xlu0 0
    %114 = vperm.xlu0 %113, %v102
    %v115 = vpop.permute.xlu0 %114
    %118 = vset.pattern.permute.xlu0 0
    %119 = vperm.xlu0 %118, %v103
    %v120 = vpop.permute.xlu0 %119
    %123 = vset.pattern.permute.xlu0 0
    %124 = vperm.xlu0 %123, %v104
    %v125 = vpop.permute.xlu0 %124
    %128 = vset.pattern.permute.xlu0 0
    %129 = vperm.xlu0 %128, %v105
    %v130 = vpop.permute.xlu0 %129
    %133 = vset.pattern.permute.xlu0 0
    %134 = vperm.xlu0 %133, %v106
    %v135 = vpop.permute.xlu0 %134
    %v137 = vlaneseq
    %v138 = vshrl.u32 %v137, 7
    %v139 = vsub.s32 1, %v138
    %v140 = vrot.slane %v33, %v139
    %v141 = vlaneseq
    %v142 = vshrl.u32 %v141, 7
    %v143 = vsub.s32 3, %v142
    %v144 = vrot.slane %v33, %v143
    %v147 = vlaneseq
    %v148 = vshrl.u32 %v147, 7
    %v149 = vsub.s32 1, %v148
    %v150 = vrot.slane %v140, %v149
    %v151 = vlaneseq
    %v152 = vshrl.u32 %v151, 7
    %v153 = vsub.s32 1, %v152
    %v154 = vrot.slane %v144, %v153
    %v155 = vmul.f32 %v110, %v150
    %v156 = vmul.f32 %v110, %v154
    %v157 = vmul.f32 %v115, %v150
    %v158 = vmul.f32 %v115, %v154
    %v159 = vmul.f32 %v120, %v150
    %v160 = vmul.f32 %v120, %v154
    %v161 = vmul.f32 %v125, %v150
    %v162 = vmul.f32 %v125, %v154
    %v163 = vmul.f32 %v130, %v150
    %v164 = vmul.f32 %v130, %v154
    %v165 = vmul.f32 %v135, %v150
    %v166 = vmul.f32 %v135, %v154
    %v167 = vadd.f32 %v89, %v155
    %v168 = vadd.f32 %v90, %v156
    %v169 = vadd.f32 %v91, %v157
    %v170 = vadd.f32 %v92, %v158
    %v171 = vadd.f32 %v93, %v159
    %v172 = vadd.f32 %v94, %v160
    %v173 = vadd.f32 %v95, %v161
    %v174 = vadd.f32 %v96, %v162
    %v175 = vadd.f32 %v97, %v163
    %v176 = vadd.f32 %v98, %v164
    %v177 = vadd.f32 %v99, %v165
    %v178 = vadd.f32 %v100, %v166
    %v179 = vld [vmem:[%s3] sm:$0xff]
    %v180 = vld [vmem:[%s3 + $0x8] sm:$0xff]
    %v181 = vld [vmem:[%s3 + $0x10] sm:$0xff]
    %v182 = vld [vmem:[%s3 + $0x18] sm:$0xff]
    %v183 = vld [vmem:[%s3 + $0x20] sm:$0xff]
    %v184 = vld [vmem:[%s3 + $0x28] sm:$0xff]
    %186 = vset.pattern.permute.xlu0 0
    %187 = vperm.xlu0 %186, %v179
    %v188 = vpop.permute.xlu0 %187
    %191 = vset.pattern.permute.xlu0 0
    %192 = vperm.xlu0 %191, %v180
    %v193 = vpop.permute.xlu0 %192
    %196 = vset.pattern.permute.xlu0 0
    %197 = vperm.xlu0 %196, %v181
    %v198 = vpop.permute.xlu0 %197
    %201 = vset.pattern.permute.xlu0 0
    %202 = vperm.xlu0 %201, %v182
    %v203 = vpop.permute.xlu0 %202
    %206 = vset.pattern.permute.xlu0 0
    %207 = vperm.xlu0 %206, %v183
    %v208 = vpop.permute.xlu0 %207
    %211 = vset.pattern.permute.xlu0 0
    %212 = vperm.xlu0 %211, %v184
    %v213 = vpop.permute.xlu0 %212
    %v215 = vadd.f32 %v167, %v188
    %v216 = vadd.f32 %v168, %v188
    %v217 = vadd.f32 %v169, %v193
    %v218 = vadd.f32 %v170, %v193
    %v219 = vadd.f32 %v171, %v198
    %v220 = vadd.f32 %v172, %v198
    %v221 = vadd.f32 %v173, %v203
    %v222 = vadd.f32 %v174, %v203
    %v223 = vadd.f32 %v175, %v208
    %v224 = vadd.f32 %v176, %v208
    %v225 = vadd.f32 %v177, %v213
    %v226 = vadd.f32 %v178, %v213
    %v227 = vtanh.pop %v215
    %v228 = vtanh.pop %v216
    %v229 = vtanh.pop %v217
    %v230 = vtanh.pop %v218
    %v231 = vtanh.pop %v219
    %v232 = vtanh.pop %v220
    %v233 = vtanh.pop %v221
    %v234 = vtanh.pop %v222
    %v235 = vtanh.pop %v223
    %v236 = vtanh.pop %v224
    %v237 = vtanh.pop %v225
    %v238 = vtanh.pop %v226
    %v239 = vld [vmem:[%s4] sm:$0xff]
    %v240 = vld [vmem:[%s4 + $0x8] sm:$0xff]
    %v241 = vld [vmem:[%s4 + $0x10] sm:$0xff]
    %v242 = vld [vmem:[%s4 + $0x18] sm:$0xff]
    %v243 = vld [vmem:[%s4 + $0x20] sm:$0xff]
    %v244 = vld [vmem:[%s4 + $0x28] sm:$0xff]
    %v245 = vld [vmem:[%s5] sm:$0xff]
    %v246 = vld [vmem:[%s5 + $0x8] sm:$0xff]
    %v247 = vld [vmem:[%s5 + $0x10] sm:$0xff]
    %v248 = vld [vmem:[%s5 + $0x18] sm:$0xff]
    %v249 = vld [vmem:[%s5 + $0x20] sm:$0xff]
    %v250 = vld [vmem:[%s5 + $0x28] sm:$0xff]
    %252 = vset.pattern.permute.xlu0 0
    %253 = vperm.xlu0 %252, %v245
    %v254 = vpop.permute.xlu0 %253
    %257 = vset.pattern.permute.xlu0 0
    %258 = vperm.xlu0 %257, %v246
    %v259 = vpop.permute.xlu0 %258
    %262 = vset.pattern.permute.xlu0 0
    %263 = vperm.xlu0 %262, %v247
    %v264 = vpop.permute.xlu0 %263
    %267 = vset.pattern.permute.xlu0 0
    %268 = vperm.xlu0 %267, %v248
    %v269 = vpop.permute.xlu0 %268
    %272 = vset.pattern.permute.xlu0 0
    %273 = vperm.xlu0 %272, %v249
    %v274 = vpop.permute.xlu0 %273
    %277 = vset.pattern.permute.xlu0 0
    %278 = vperm.xlu0 %277, %v250
    %v279 = vpop.permute.xlu0 %278
    %vm281 = vcmask 392192
    %v283 = vsel %vm281, %v239, 0
    %v286 = vsel %vm281, %v240, 0
    %v289 = vsel %vm281, %v241, 0
    %v292 = vsel %vm281, %v242, 0
    %v295 = vsel %vm281, %v243, 0
    %v298 = vsel %vm281, %v244, 0
    %300 = vmatprep.subr.mxu0 %v228
    %301 = vmatpush1.msra.mxu0 %v227
    %302 = vmatprep.subr.mxu0 %v230
    %303 = vmatpush1.msra.mxu0 %v229
    %304 = vmatprep.subr.mxu0 %v232
    %305 = vmatpush1.msra.mxu0 %v231
    %306 = vmatprep.subr.mxu0 %v234
    %307 = vmatpush1.msra.mxu0 %v233
    %308 = vmatprep.subr.mxu0 %v236
    %309 = vmatpush1.msra.mxu0 %v235
    %310 = vmatprep.subr.mxu0 %v238
    %311 = vmatpush1.msra.mxu0 %v237
    %312 = vmatprep.subr.mxu0 0.0
    %313 = vmatpush1.msra.mxu0 0.0
    %314 = vmatprep.subr.mxu0 0.0
    %315 = vmatpush1.msra.mxu0 0.0
    %316 = vmatprep.subr.mxu0 0.0
    %317 = vmatpush1.msra.mxu0 0.0
    %318 = vmatprep.subr.mxu0 0.0
    %319 = vmatpush1.msra.mxu0 0.0
    %320 = vmatprep.subr.mxu0 0.0
    %321 = vmatpush1.msra.mxu0 0.0
    %322 = vmatprep.subr.mxu0 0.0
    %323 = vmatpush1.msra.mxu0 0.0
    %324 = vmatprep.subr.mxu0 0.0
    %325 = vmatpush1.msra.mxu0 0.0
    %326 = vmatprep.subr.mxu0 0.0
    %327 = vmatpush1.msra.mxu0 0.0
    %328 = vmatprep.subr.mxu0 0.0
    %329 = vmatpush1.msra.mxu0 0.0
    %330 = vmatprep.subr.mxu0 0.0
    %331 = vmatpush1.msra.mxu0 0.0
    %332 = vmatprep.subr.mxu0 0.0
    %333 = vmatpush1.msra.mxu0 0.0
    %334 = vmatprep.subr.mxu0 0.0
    %335 = vmatpush1.msra.mxu0 0.0
    %336 = vmatprep.subr.mxu0 0.0
    %337 = vmatpush1.msra.mxu0 0.0
    %338 = vmatprep.subr.mxu0 0.0
    %339 = vmatpush1.msra.mxu0 0.0
    %340 = vmatprep.subr.mxu0 0.0
    %341 = vmatpush1.msra.mxu0 0.0
    %342 = vmatprep.subr.mxu0 0.0
    %343 = vmatpush1.msra.mxu0 0.0
    %344 = vmatprep.subr.mxu0 0.0
    %345 = vmatpush1.msra.mxu0 0.0
    %346 = vmatprep.subr.mxu0 0.0
    %347 = vmatpush1.msra.mxu0 0.0
    %348 = vmatprep.subr.mxu0 0.0
    %349 = vmatpush1.msra.mxu0 0.0
    %350 = vmatprep.subr.mxu0 0.0
    %351 = vmatpush1.msra.mxu0 0.0
    %352 = vmatprep.subr.mxu0 0.0
    %353 = vmatpush1.msra.mxu0 0.0
    %354 = vmatprep.subr.mxu0 0.0
    %355 = vmatpush1.msra.mxu0 0.0
    %356 = vmatprep.subr.mxu0 0.0
    %357 = vmatpush1.msra.mxu0 0.0
    %358 = vmatprep.subr.mxu0 0.0
    %359 = vmatpush1.msra.mxu0 0.0
    %360 = vmatprep.subr.mxu0 0.0
    %361 = vmatpush1.msra.mxu0 0.0
    %362 = vmatprep.subr.mxu0 0.0
    %363 = vmatpush1.msra.mxu0 0.0
    %364 = vmatprep.mubr.f32.mxu0 0.0
    %365 = vmatmul.mubr.f32.gmra.mrb[0].mxu0 %v283
    %v366 = vpop.f32.mrb[0].mxu0
    %v367 = vadd.f32 %v254, %v366
    %v368 = vpop.f32.mrb[0].mxu0
    %v369 = vadd.f32 %v254, %v368
    %370 = vmatprep.mubr.f32.mxu0 0.0
    %371 = vmatmul.mubr.f32.gmra.mrb[0].mxu0 %v286
    %v372 = vpop.f32.mrb[0].mxu0
    %v373 = vadd.f32 %v259, %v372
    %v374 = vpop.f32.mrb[0].mxu0
    %v375 = vadd.f32 %v259, %v374
    %376 = vmatprep.mubr.f32.mxu0 0.0
    %377 = vmatmul.mubr.f32.gmra.mrb[0].mxu0 %v289
    %v378 = vpop.f32.mrb[0].mxu0
    %v379 = vadd.f32 %v264, %v378
    %v380 = vpop.f32.mrb[0].mxu0
    %v381 = vadd.f32 %v264, %v380
    %382 = vmatprep.mubr.f32.mxu0 0.0
    %383 = vmatmul.mubr.f32.gmra.mrb[0].mxu0 %v292
    %v384 = vpop.f32.mrb[0].mxu0
    %v385 = vadd.f32 %v269, %v384
    %v386 = vpop.f32.mrb[0].mxu0
    %v387 = vadd.f32 %v269, %v386
    %388 = vmatprep.mubr.f32.mxu0 0.0
    %389 = vmatmul.mubr.f32.gmra.mrb[0].mxu0 %v295
    %v390 = vpop.f32.mrb[0].mxu0
    %v391 = vadd.f32 %v274, %v390
    %v392 = vpop.f32.mrb[0].mxu0
    %v393 = vadd.f32 %v274, %v392
    %394 = vmatprep.mubr.f32.mxu0 0.0
    %395 = vmatmul.mubr.f32.gmra.mrb[0].mxu0 %v298
    %v396 = vpop.f32.mrb[0].mxu0
    %v397 = vadd.f32 %v279, %v396
    %v398 = vpop.f32.mrb[0].mxu0
    %v399 = vadd.f32 %v279, %v398
    %400 = vdwg.mxu0
    %v401 = vtanh.pop %v367
    %v402 = vtanh.pop %v369
    %v403 = vtanh.pop %v373
    %v404 = vtanh.pop %v375
    %v405 = vtanh.pop %v379
    %v406 = vtanh.pop %v381
    %v407 = vtanh.pop %v385
    %v408 = vtanh.pop %v387
    %v409 = vtanh.pop %v391
    %v410 = vtanh.pop %v393
    %v411 = vtanh.pop %v397
    %v412 = vtanh.pop %v399
    %v413 = vld [vmem:[%s6] sm:$0xff]
    %v414 = vld [vmem:[%s6 + $0x8] sm:$0xff]
    %v415 = vld [vmem:[%s6 + $0x10] sm:$0xff]
    %v416 = vld [vmem:[%s6 + $0x18] sm:$0xff]
    %v417 = vld [vmem:[%s7] sm:$0xff]
    %v418 = vld [vmem:[%s7 + $0x8] sm:$0xff]
    %v419 = vld [vmem:[%s7 + $0x10] sm:$0xff]
    %v420 = vld [vmem:[%s7 + $0x18] sm:$0xff]
    %422 = vset.pattern.permute.xlu0 0
    %423 = vperm.xlu0 %422, %v417
    %v424 = vpop.permute.xlu0 %423
    %427 = vset.pattern.permute.xlu0 0
    %428 = vperm.xlu0 %427, %v418
    %v429 = vpop.permute.xlu0 %428
    %432 = vset.pattern.permute.xlu0 0
    %433 = vperm.xlu0 %432, %v419
    %v434 = vpop.permute.xlu0 %433
    %437 = vset.pattern.permute.xlu0 0
    %438 = vperm.xlu0 %437, %v420
    %v439 = vpop.permute.xlu0 %438
    %v442 = vsel %vm281, %v413, 0
    %v445 = vsel %vm281, %v414, 0
    %v448 = vsel %vm281, %v415, 0
    %v451 = vsel %vm281, %v416, 0
    %453 = vmatprep.subr.mxu0 %v402
    %454 = vmatpush1.msra.mxu0 %v401
    %455 = vmatprep.subr.mxu0 %v404
    %456 = vmatpush1.msra.mxu0 %v403
    %457 = vmatprep.subr.mxu0 %v406
    %458 = vmatpush1.msra.mxu0 %v405
    %459 = vmatprep.subr.mxu0 %v408
    %460 = vmatpush1.msra.mxu0 %v407
    %461 = vmatprep.subr.mxu0 %v410
    %462 = vmatpush1.msra.mxu0 %v409
    %463 = vmatprep.subr.mxu0 %v412
    %464 = vmatpush1.msra.mxu0 %v411
    %465 = vmatprep.subr.mxu0 0.0
    %466 = vmatpush1.msra.mxu0 0.0
    %467 = vmatprep.subr.mxu0 0.0
    %468 = vmatpush1.msra.mxu0 0.0
    %469 = vmatprep.subr.mxu0 0.0
    %470 = vmatpush1.msra.mxu0 0.0
    %471 = vmatprep.subr.mxu0 0.0
    %472 = vmatpush1.msra.mxu0 0.0
    %473 = vmatprep.subr.mxu0 0.0
    %474 = vmatpush1.msra.mxu0 0.0
    %475 = vmatprep.subr.mxu0 0.0
    %476 = vmatpush1.msra.mxu0 0.0
    %477 = vmatprep.subr.mxu0 0.0
    %478 = vmatpush1.msra.mxu0 0.0
    %479 = vmatprep.subr.mxu0 0.0
    %480 = vmatpush1.msra.mxu0 0.0
    %481 = vmatprep.subr.mxu0 0.0
    %482 = vmatpush1.msra.mxu0 0.0
    %483 = vmatprep.subr.mxu0 0.0
    %484 = vmatpush1.msra.mxu0 0.0
    %485 = vmatprep.subr.mxu0 0.0
    %486 = vmatpush1.msra.mxu0 0.0
    %487 = vmatprep.subr.mxu0 0.0
    %488 = vmatpush1.msra.mxu0 0.0
    %489 = vmatprep.subr.mxu0 0.0
    %490 = vmatpush1.msra.mxu0 0.0
    %491 = vmatprep.subr.mxu0 0.0
    %492 = vmatpush1.msra.mxu0 0.0
    %493 = vmatprep.subr.mxu0 0.0
    %494 = vmatpush1.msra.mxu0 0.0
    %495 = vmatprep.subr.mxu0 0.0
    %496 = vmatpush1.msra.mxu0 0.0
    %497 = vmatprep.subr.mxu0 0.0
    %498 = vmatpush1.msra.mxu0 0.0
    %499 = vmatprep.subr.mxu0 0.0
    %500 = vmatpush1.msra.mxu0 0.0
    %501 = vmatprep.subr.mxu0 0.0
    %502 = vmatpush1.msra.mxu0 0.0
    %503 = vmatprep.subr.mxu0 0.0
    %504 = vmatpush1.msra.mxu0 0.0
    %505 = vmatprep.subr.mxu0 0.0
    %506 = vmatpush1.msra.mxu0 0.0
    %507 = vmatprep.subr.mxu0 0.0
    %508 = vmatpush1.msra.mxu0 0.0
    %509 = vmatprep.subr.mxu0 0.0
    %510 = vmatpush1.msra.mxu0 0.0
    %511 = vmatprep.subr.mxu0 0.0
    %512 = vmatpush1.msra.mxu0 0.0
    %513 = vmatprep.subr.mxu0 0.0
    %514 = vmatpush1.msra.mxu0 0.0
    %515 = vmatprep.subr.mxu0 0.0
    %516 = vmatpush1.msra.mxu0 0.0
    %517 = vmatprep.mubr.f32.mxu0 0.0
    %518 = vmatmul.mubr.f32.gmra.mrb[0].mxu0 %v442
    %v519 = vpop.f32.mrb[0].mxu0
    %v520 = vadd.f32 %v424, %v519
    %v521 = vpop.f32.mrb[0].mxu0
    %v522 = vadd.f32 %v424, %v521
    %523 = vmatprep.mubr.f32.mxu0 0.0
    %524 = vmatmul.mubr.f32.gmra.mrb[0].mxu0 %v445
    %v525 = vpop.f32.mrb[0].mxu0
    %v526 = vadd.f32 %v429, %v525
    %v527 = vpop.f32.mrb[0].mxu0
    %v528 = vadd.f32 %v429, %v527
    %529 = vmatprep.mubr.f32.mxu0 0.0
    %530 = vmatmul.mubr.f32.gmra.mrb[0].mxu0 %v448
    %v531 = vpop.f32.mrb[0].mxu0
    %v532 = vadd.f32 %v434, %v531
    %v533 = vpop.f32.mrb[0].mxu0
    %v534 = vadd.f32 %v434, %v533
    %535 = vmatprep.mubr.f32.mxu0 0.0
    %536 = vmatmul.mubr.f32.gmra.mrb[0].mxu0 %v451
    %v537 = vpop.f32.mrb[0].mxu0
    %v538 = vadd.f32 %v439, %v537
    %v539 = vpop.f32.mrb[0].mxu0
    %v540 = vadd.f32 %v439, %v539
    %541 = vdwg.mxu0
    %v542 = vtanh.pop %v520
    %v543 = vtanh.pop %v522
    %v544 = vtanh.pop %v526
    %v545 = vtanh.pop %v528
    %v546 = vtanh.pop %v532
    %v547 = vtanh.pop %v534
    %v548 = vtanh.pop %v538
    %v549 = vtanh.pop %v540
    %v550 = vld [vmem:[%s8] sm:$0x3]
    %vm551 = vcmask 261120
    %v553 = vsel %vm551, %v550, 0
    %555 = vmatprep.subr.mxu0 %v543
    %556 = vmatpush1.msra.mxu0 %v542
    %557 = vmatprep.subr.mxu0 %v545
    %558 = vmatpush1.msra.mxu0 %v544
    %559 = vmatprep.subr.mxu0 %v547
    %560 = vmatpush1.msra.mxu0 %v546
    %561 = vmatprep.subr.mxu0 %v549
    %562 = vmatpush1.msra.mxu0 %v548
    %563 = vmatprep.subr.mxu0 0.0
    %564 = vmatpush1.msra.mxu0 0.0
    %565 = vmatprep.subr.mxu0 0.0
    %566 = vmatpush1.msra.mxu0 0.0
    %567 = vmatprep.subr.mxu0 0.0
    %568 = vmatpush1.msra.mxu0 0.0
    %569 = vmatprep.subr.mxu0 0.0
    %570 = vmatpush1.msra.mxu0 0.0
    %571 = vmatprep.subr.mxu0 0.0
    %572 = vmatpush1.msra.mxu0 0.0
    %573 = vmatprep.subr.mxu0 0.0
    %574 = vmatpush1.msra.mxu0 0.0
    %575 = vmatprep.subr.mxu0 0.0
    %576 = vmatpush1.msra.mxu0 0.0
    %577 = vmatprep.subr.mxu0 0.0
    %578 = vmatpush1.msra.mxu0 0.0
    %579 = vmatprep.subr.mxu0 0.0
    %580 = vmatpush1.msra.mxu0 0.0
    %581 = vmatprep.subr.mxu0 0.0
    %582 = vmatpush1.msra.mxu0 0.0
    %583 = vmatprep.subr.mxu0 0.0
    %584 = vmatpush1.msra.mxu0 0.0
    %585 = vmatprep.subr.mxu0 0.0
    %586 = vmatpush1.msra.mxu0 0.0
    %587 = vmatprep.subr.mxu0 0.0
    %588 = vmatpush1.msra.mxu0 0.0
    %589 = vmatprep.subr.mxu0 0.0
    %590 = vmatpush1.msra.mxu0 0.0
    %591 = vmatprep.subr.mxu0 0.0
    %592 = vmatpush1.msra.mxu0 0.0
    %593 = vmatprep.subr.mxu0 0.0
    %594 = vmatpush1.msra.mxu0 0.0
    %595 = vmatprep.subr.mxu0 0.0
    %596 = vmatpush1.msra.mxu0 0.0
    %597 = vmatprep.subr.mxu0 0.0
    %598 = vmatpush1.msra.mxu0 0.0
    %599 = vmatprep.subr.mxu0 0.0
    %600 = vmatpush1.msra.mxu0 0.0
    %601 = vmatprep.subr.mxu0 0.0
    %602 = vmatpush1.msra.mxu0 0.0
    %603 = vmatprep.subr.mxu0 0.0
    %604 = vmatpush1.msra.mxu0 0.0
    %605 = vmatprep.subr.mxu0 0.0
    %606 = vmatpush1.msra.mxu0 0.0
    %607 = vmatprep.subr.mxu0 0.0
    %608 = vmatpush1.msra.mxu0 0.0
    %609 = vmatprep.subr.mxu0 0.0
    %610 = vmatpush1.msra.mxu0 0.0
    %611 = vmatprep.subr.mxu0 0.0
    %612 = vmatpush1.msra.mxu0 0.0
    %613 = vmatprep.subr.mxu0 0.0
    %614 = vmatpush1.msra.mxu0 0.0
    %615 = vmatprep.subr.mxu0 0.0
    %616 = vmatpush1.msra.mxu0 0.0
    %617 = vmatprep.subr.mxu0 0.0
    %618 = vmatpush1.msra.mxu0 0.0
    %619 = vmatprep.mubr.f32.mxu0 0.0
    %620 = vmatmul.mubr.f32.gmra.mrb[0].mxu0 %v553
    %v621 = vpop.f32.mrb[0].mxu0
    %v622 = vadd.f32 0.0, %v621
    %v623 = vpop.f32.mrb[0].mxu0
    %v624 = vadd.f32 0.0, %v623
    %625 = vdwg.mxu0
    %v626 = vsub.f32 %v33, 1.0
    %v627 = vmul.f32 %v33, %v626
    %v628 = vadd.f32 %v33, 1.0
    %v630 = vrot.slane %v628, 7
    %v631 = vrot.slane %v630, 2
    %v633 = vmul.f32 %v627, %v631
    %v635 = vlaneseq
    %v636 = vshrl.u32 %v635, 7
    %v637 = vsub.s32 0, %v636
    %v638 = vrot.slane %v633, %v637
    %v639 = vlaneseq
    %v640 = vshrl.u32 %v639, 7
    %v641 = vsub.s32 2, %v640
    %v642 = vrot.slane %v633, %v641
    %v645 = vlaneseq
    %v646 = vshrl.u32 %v645, 7
    %v647 = vsub.s32 0, %v646
    %v648 = vrot.slane %v638, %v647
    %v649 = vlaneseq
    %v650 = vshrl.u32 %v649, 7
    %v651 = vsub.s32 0, %v650
    %v652 = vrot.slane %v642, %v651
    %v653 = vmul.f32 %v622, %v648
    %v654 = vmul.f32 %v624, %v652
    %v657 = vcombine.low %v653, %v654
    %v659 = vunpack.c.l.s4 1983009808
    %v660 = vunpack.c.0.s8 %v659
    %v661 = vlaneseq
    %v662 = vshrl.u32 %v661, 7
    %v663 = vsub.s32 %v660, %v662
    %v664 = vrot.slane %v657, %v663
    %666 = vst [vmem:[#allocation2] sm:$0xf] %v664
    // Predicated region
    $region38: #{tpu_custom_call.1} parent=1 // pred_check
      _
    $region39: #{tpu_custom_call.1} parent=1 // pred_check_branch
      %668 = sbr.rel (0) target = $region41
    $region40: #{tpu_custom_call.1} parent=1 // pred_region
      %s670 = ssub.s32 64, 64
      %671 = vsyncadd [#allocation3], %s670
      %s673 = sshll.u32 [#allocation2], 4
      %s674 = int_to_ptr.vmem [resolvable:$true] %s673
      %676 = dma.vmem_to_hbm [thread:$0]  %s674, 64, %s9, [#allocation3]
    $region41: #{tpu_custom_call.1} parent=1 // pred_fallthru
      _
    // Predicated region
    $region42: #{tpu_custom_call.1} parent=1 // pred_check
      _
    $region43: #{tpu_custom_call.1} parent=1 // pred_check_branch
      %678 = sbr.rel (0) target = $region45
    $region44: #{tpu_custom_call.1} parent=1 // pred_region
      %679 = dma.done [#allocation3], 64
    $region45: #{tpu_custom_call.1} parent=1 // pred_fallthru
      _
    %680 = vsyncpa [#allocation3], 1

</llo_original>
